<compile_context>
chip_gen: v6e
topology: v6e:2x2x1
jax: 0.10.0
libtpu: 0.0.40
codegen_flags: <defaults>
</compile_context>

<pallas_src>
import functools

import jax
import jax.numpy as jnp
from jax.experimental import pallas as pl
from jax.experimental.pallas import tpu as pltpu


def _round_up(x, m):
    return ((x + m - 1) // m) * m


# ----------------------------------------------------------------------------
# Pallas kernel: fused tiled matmul + bias + optional ReLU  (MXU hot path)
#   grid = (M/tm, N/tn, K/tk); reduction axis last ("arbitrary").
#   single_k=True  -> direct compute+epilogue store (convs, fc3).
#   single_k=False -> accumulate f32 into the resident output block (fc1/fc2).
# ----------------------------------------------------------------------------
def _matmul_bias_act_kernel(x_ref, w_ref, b_ref, o_ref, *, relu, single_k):
    if single_k:
        r = jnp.dot(x_ref[...], w_ref[...], preferred_element_type=jnp.float32)
        r = r + b_ref[...]                       # (tm, tn) + (1, tn), f32
        if relu:
            r = jnp.maximum(r, 0.0)
        o_ref[...] = r.astype(o_ref.dtype)
    else:
        @pl.when(pl.program_id(2) == 0)
        def _():
            o_ref[...] = jnp.zeros_like(o_ref)

        o_ref[...] += jnp.dot(
            x_ref[...], w_ref[...], preferred_element_type=jnp.float32
        )

        @pl.when(pl.program_id(2) == pl.num_programs(2) - 1)
        def _():
            r = o_ref[...] + b_ref[...]
            if relu:
                r = jnp.maximum(r, 0.0)
            o_ref[...] = r


def matmul_bias_act(x, w, b, *, relu, tm, tk, tn, n_out=None,
                    out_dtype=jnp.float32, weight_buffers=2):
    """y = (x @ w + b)[:, :n_out], optional ReLU.

    x : (M, K) float, cast to bf16 for the MXU (padded here to (Mp, Kp)).
    w : (Kp, Np) bf16, ALREADY padded so tk | Kp and tn | Np (prepare_params).
    b : (1, Np)  f32, ALREADY padded.
    out_dtype is forced to f32 when K is split across grid steps (in-place
    accumulation in the output block).
    """
    M, K = x.shape
    Kp, Np = w.shape
    assert K <= Kp and Kp % tk == 0 and Np % tn == 0, (K, Kp, tk, Np, tn)
    n_out = Np if n_out is None else n_out

    tm = min(tm, _round_up(M, 16))
    Mp = _round_up(M, tm)

    xb = x.astype(jnp.bfloat16)
    if (M, K) != (Mp, Kp):
        xb = jnp.pad(xb, ((0, Mp - M), (0, Kp - K)))

    k_steps = Kp // tk
    single_k = k_steps == 1
    if not single_k:
        out_dtype = jnp.float32   # accumulate in place across K steps

    w_spec_kwargs = {}
    if weight_buffers != 2:       # deeper pipelining on the streamed weights
        w_spec_kwargs["pipeline_mode"] = pl.Buffered(weight_buffers)

    cost = pl.CostEstimate(
        flops=2 * Mp * Kp * Np,
        transcendentals=0,
        bytes_accessed=Mp * Kp * 2 + Kp * Np * 2 + Mp * Np * 4 + Np * 4,
    )

    out = pl.pallas_call(
        functools.partial(_matmul_bias_act_kernel, relu=relu, single_k=single_k),
        out_shape=jax.ShapeDtypeStruct((Mp, Np), out_dtype),
        grid=(Mp // tm, Np // tn, k_steps),
        in_specs=[
            pl.BlockSpec((tm, tk), lambda i, j, k: (i, k)),
            pl.BlockSpec((tk, tn), lambda i, j, k: (k, j), **w_spec_kwargs),
            pl.BlockSpec((1, tn), lambda i, j, k: (0, j)),
        ],
        out_specs=pl.BlockSpec((tm, tn), lambda i, j, k: (i, j)),
        compiler_params=pltpu.CompilerParams(
            dimension_semantics=("parallel", "parallel", "arbitrary"),
            vmem_limit_bytes=32 * 1024 * 1024,
        ),
        cost_estimate=cost,
    )(xb, w, b)

    if (Mp, Np) != (M, n_out):
        out = out[:M, :n_out]
    return out


# ----------------------------------------------------------------------------
# Glue: im2col conv, pooling
# ----------------------------------------------------------------------------
def conv2d(x, w2d, b2d, *, cout, k, s, pad, relu):
    """x: (N,H,W,Cin) NHWC; w2d: (Kp, Np) bf16 prepared; b2d: (1, Np) f32.

    Single-K-step fused matmul; returns bf16 NHWC activations.
    """
    n = x.shape[0]
    patches = jax.lax.conv_general_dilated_patches(
        x.astype(jnp.bfloat16),
        filter_shape=(k, k),
        window_strides=(s, s),
        padding=((pad, pad), (pad, pad)),
        dimension_numbers=("NHWC", "HWIO", "NHWC"),
    )  # (N, Ho, Wo, Cin*k*k), feature order channel-major (c, kh, kw)
    _, ho, wo, kk = patches.shape
    kp, np_full = w2d.shape
    m = n * ho * wo
    tm = min(256, _round_up(m, 16))
    m_blocks = _round_up(m, tm) // tm
    # Keep >=2 blocks on a parallel grid axis (v7x has 2 TensorCores): if the
    # M axis has a single block, split N into 128-wide blocks instead.
    tn = np_full if m_blocks >= 2 else min(np_full, 128)
    y = matmul_bias_act(
        patches.reshape(m, kk), w2d, b2d, relu=relu,
        tm=tm, tk=kp, tn=tn, n_out=cout, out_dtype=jnp.bfloat16,
    )
    return y.reshape(n, ho, wo, cout)


def maxpool_3x3_s2(x):
    """nn.MaxPool2d(kernel_size=3, stride=2), NHWC; XLA-fused VPU max tree."""
    N, H, W, C = x.shape
    Ho = (H - 3) // 2 + 1
    Wo = (W - 3) // 2 + 1
    out = None
    for kh in range(3):
        for kw in range(3):
            v = x[:, kh:kh + 2 * Ho - 1:2, kw:kw + 2 * Wo - 1:2, :]
            out = v if out is None else jnp.maximum(out, v)
    return out


def adaptive_avg_pool(x, out_h, out_w):
    """nn.AdaptiveAvgPool2d semantics, NHWC. Tiny; kept in plain JAX."""
    N, H, W, C = x.shape
    rows = []
    for i in range(out_h):
        h0 = (i * H) // out_h
        h1 = -(-((i + 1) * H) // out_h)
        cols = []
        for j in range(out_w):
            w0 = (j * W) // out_w
            w1 = -(-((j + 1) * W) // out_w)
            cols.append(jnp.mean(x[:, h0:h1, w0:w1, :], axis=(1, 2)))
        rows.append(jnp.stack(cols, axis=1))
    return jnp.stack(rows, axis=1)  # (N, out_h, out_w, C)


# ----------------------------------------------------------------------------
# One-time parameter preparation (transpose / reshape / pad / bf16 cast).
# All weight & bias padding happens here, never per forward call.
# ----------------------------------------------------------------------------
def prepare_params(params):
    prep = {}
    # Conv weights: torch (Cout, Cin, KH, KW) -> (Cin*KH*KW, Cout), padded to
    # (round_up(K,128), round_up(Cout,128)), bf16.  Row order (c, kh, kw)
    # matches conv_general_dilated_patches' channel-major feature order.
    for i in range(1, 6):
        w = params[f"conv{i}_w"]
        cout, cin, kh, kw = w.shape
        kk = cin * kh * kw
        kp = _round_up(kk, 128)
        np_full = _round_up(cout, 128)
        w2d = jnp.transpose(w, (1, 2, 3, 0)).reshape(kk, cout)
        prep[f"conv{i}_w"] = jnp.pad(
            w2d, ((0, kp - kk), (0, np_full - cout))
        ).astype(jnp.bfloat16)
        prep[f"conv{i}_b"] = jnp.pad(
            params[f"conv{i}_b"].astype(jnp.float32), (0, np_full - cout)
        ).reshape(1, np_full)
    # FC weights: torch (out, in) -> (in, out) bf16; fc3 lane-padded once.
    # TODO(synk): optional int8 (v5e/v6e) / fp8 (v7x) FC-weight quantization is
    #             a numeric-changing lever and is not applied here.
    prep["fc1_w"] = params["fc1_w"].T.astype(jnp.bfloat16)
    prep["fc1_b"] = params["fc1_b"].astype(jnp.float32).reshape(1, -1)
    prep["fc2_w"] = params["fc2_w"].T.astype(jnp.bfloat16)
    prep["fc2_b"] = params["fc2_b"].astype(jnp.float32).reshape(1, -1)
    n_cls = params["fc3_w"].shape[0]
    n_pad = _round_up(n_cls, 128) - n_cls
    prep["fc3_w"] = jnp.pad(
        params["fc3_w"].T.astype(jnp.bfloat16), ((0, 0), (0, n_pad))
    )
    prep["fc3_b"] = jnp.pad(
        params["fc3_b"].astype(jnp.float32), (0, n_pad)
    ).reshape(1, -1)
    return prep


# ----------------------------------------------------------------------------
# AlexNet forward
# ----------------------------------------------------------------------------
def alexnet_forward(params, x_nchw, *, num_classes=1000):
    x = jnp.transpose(x_nchw, (0, 2, 3, 1)).astype(jnp.bfloat16)  # NCHW -> NHWC
    # features (every conv = single-K-step fused matmul, bf16 activations)
    x = conv2d(x, params["conv1_w"], params["conv1_b"], cout=64, k=11, s=4, pad=2, relu=True)
    x = maxpool_3x3_s2(x)
    x = conv2d(x, params["conv2_w"], params["conv2_b"], cout=192, k=5, s=1, pad=2, relu=True)
    x = maxpool_3x3_s2(x)
    x = conv2d(x, params["conv3_w"], params["conv3_b"], cout=384, k=3, s=1, pad=1, relu=True)
    x = conv2d(x, params["conv4_w"], params["conv4_b"], cout=256, k=3, s=1, pad=1, relu=True)
    x = conv2d(x, params["conv5_w"], params["conv5_b"], cout=256, k=3, s=1, pad=1, relu=True)
    x = maxpool_3x3_s2(x)
    # avgpool + flatten (flatten in NCHW order to match torch.flatten(x, 1))
    x = adaptive_avg_pool(x, 6, 6)                               # (N, 6, 6, 256)
    x = jnp.transpose(x, (0, 3, 1, 2)).reshape(x.shape[0], -1)   # (N, 9216)
    # classifier (Dropout == identity in eval mode)
    # TODO(synk): Dropout is treated as identity (inference semantics).
    x = matmul_bias_act(x, params["fc1_w"], params["fc1_b"], relu=True,
                        tm=8, tk=2304, tn=2048)                    # grid 1x2x4
    x = matmul_bias_act(x, params["fc2_w"], params["fc2_b"], relu=True,
                        tm=8, tk=2048, tn=2048, weight_buffers=3)  # grid 1x2x2
    x = matmul_bias_act(x, params["fc3_w"], params["fc3_b"], relu=False,
                        tm=8, tk=4096, tn=512, n_out=num_classes)  # grid 1x2x1
    return x


def init_params(key, num_classes=1000):
    """Deterministic synthetic parameters in torch layouts."""
    shapes = {
        "conv1_w": (64, 3, 11, 11),   "conv1_b": (64,),
        "conv2_w": (192, 64, 5, 5),   "conv2_b": (192,),
        "conv3_w": (384, 192, 3, 3),  "conv3_b": (384,),
        "conv4_w": (256, 384, 3, 3),  "conv4_b": (256,),
        "conv5_w": (256, 256, 3, 3),  "conv5_b": (256,),
        "fc1_w": (4096, 256 * 6 * 6), "fc1_b": (4096,),
        "fc2_w": (4096, 4096),        "fc2_b": (4096,),
        "fc3_w": (num_classes, 4096), "fc3_b": (num_classes,),
    }
    params = {}
    keys = jax.random.split(key, len(shapes))
    for (name, shape), k in zip(shapes.items(), keys):
        if name.endswith("_w"):
            fan_in = 1
            for d in shape[1:]:
                fan_in *= d
            params[name] = jax.random.normal(k, shape, jnp.float32) * (2.0 / fan_in) ** 0.5
        else:
            params[name] = jnp.zeros(shape, jnp.float32)
    return params


if __name__ == "__main__":
    key = jax.random.PRNGKey(0)
    pkey, xkey = jax.random.split(key)
    raw_params = init_params(pkey, num_classes=1000)
    params = prepare_params(raw_params)   # one-time weight prep (no per-call cost)
    # SMALL input consistent with the module: 3 channels, 64x64 spatial, batch 2.
    x = jax.random.normal(xkey, (2, 3, 64, 64), dtype=jnp.float32)

    # One-off numerical check of the im2col / weight-reshape ordering (conv1)
    # against lax.conv_general_dilated on the same bf16 operands.
    xb = jnp.transpose(x, (0, 2, 3, 1)).astype(jnp.bfloat16)
    ref = jax.lax.conv_general_dilated(
        xb, raw_params["conv1_w"].astype(jnp.bfloat16),
        window_strides=(4, 4), padding=((2, 2), (2, 2)),
        dimension_numbers=("NHWC", "OIHW", "NHWC"),
        preferred_element_type=jnp.float32,
    ) + raw_params["conv1_b"].reshape(1, 1, 1, -1)
    ref = jnp.maximum(ref, 0.0)
    got = conv2d(xb, params["conv1_w"], params["conv1_b"], cout=64,
                 k=11, s=4, pad=2, relu=True).astype(jnp.float32)
    assert got.shape == ref.shape, (got.shape, ref.shape)
    assert bool(jnp.allclose(got, ref, atol=5e-2, rtol=5e-2)), \
        "conv1 im2col/weight ordering mismatch"

    fwd = jax.jit(alexnet_forward)
    out = fwd(params, x)
    out = jax.block_until_ready(out)

    assert out.shape == (2, 1000), out.shape
    assert out.dtype == jnp.float32
    assert bool(jnp.all(jnp.isfinite(out)))
    print("KERNEL_OK")
</pallas_src>

<mosaic_0001>
module attributes {stable_mosaic.version = 11 : i64} {
  func.func @_matmul_bias_act_kernel(%arg0: i32, %arg1: i32, %arg2: i32, %arg3: memref<256x384xbf16, #tpu.memory_space<vmem>>, %arg4: memref<384x128xbf16, #tpu.memory_space<vmem>>, %arg5: memref<1x128xf32, #tpu.memory_space<vmem>>, %arg6: memref<256x128xbf16, #tpu.memory_space<vmem>>) attributes {dimension_semantics = [#tpu.dimension_semantics<parallel>, #tpu.dimension_semantics<parallel>, #tpu.dimension_semantics<arbitrary>], iteration_bounds = array<i64: 2, 1, 1>, scalar_prefetch = 0 : i64, scratch_operands = 0 : i64, tpu.core_type = #tpu.core_type<tc>, window_params = [{transform_indices = @transform_0, window_bounds = array<i64: 256, 384>}, {transform_indices = @transform_1, window_bounds = array<i64: 384, 128>}, {transform_indices = @transform_2, window_bounds = array<i64: 1, 128>}, {transform_indices = @transform_3, window_bounds = array<i64: 256, 128>}]} {
    %c0 = arith.constant 0 : index
    %c0_0 = arith.constant 0 : index
    %0 = vector.load %arg3[%c0, %c0_0] : memref<256x384xbf16, #tpu.memory_space<vmem>>, vector<256x384xbf16>
    %c0_1 = arith.constant 0 : index
    %c0_2 = arith.constant 0 : index
    %1 = vector.load %arg4[%c0_1, %c0_2] : memref<384x128xbf16, #tpu.memory_space<vmem>>, vector<384x128xbf16>
    %cst = arith.constant dense<0.000000e+00> : vector<256x128xf32>
    %2 = tpu.matmul %0, %1, %cst {dimension_numbers = #tpu.dot_dimension_numbers<[1], [0], [0], [1], [0, 0, 1, 1], [], []>} : vector<256x384xbf16>, vector<384x128xbf16>, vector<256x128xf32> -> vector<256x128xf32>
    %c0_3 = arith.constant 0 : index
    %c0_4 = arith.constant 0 : index
    %3 = vector.load %arg5[%c0_3, %c0_4] : memref<1x128xf32, #tpu.memory_space<vmem>>, vector<1x128xf32>
    %4 = vector.broadcast %3 : vector<1x128xf32> to vector<256x128xf32>
    %5 = arith.addf %2, %4 : vector<256x128xf32>
    %cst_5 = arith.constant 0.000000e+00 : f32
    %6 = vector.broadcast %cst_5 : f32 to vector<256x128xf32>
    %7 = arith.maximumf %5, %6 : vector<256x128xf32>
    %8 = arith.truncf %7 : vector<256x128xf32> to vector<256x128xbf16>
    %c0_6 = arith.constant 0 : index
    %c0_7 = arith.constant 0 : index
    %9 = vector.load %arg6[%c0_6, %c0_7] : memref<256x128xbf16, #tpu.memory_space<vmem>>, vector<256x128xbf16>
    tpu.vector_store %arg6[%c0_6, %c0_7], %8 {strides = array<i32>} : memref<256x128xbf16, #tpu.memory_space<vmem>>, vector<256x128xbf16>,
    return
  }
  func.func @transform_0(%arg0: i32, %arg1: i32, %arg2: i32) -> (i32, i32) {
    %c0_i32 = arith.constant 0 : i32
    return %arg0, %arg2 : i32, i32
  }
  func.func @transform_1(%arg0: i32, %arg1: i32, %arg2: i32) -> (i32, i32) {
    %c0_i32 = arith.constant 0 : i32
    return %arg2, %arg1 : i32, i32
  }
  func.func @transform_2(%arg0: i32, %arg1: i32, %arg2: i32) -> (i32, i32) {
    %c0_i32 = arith.constant 0 : i32
    %c0_i32_0 = arith.constant 0 : i32
    return %c0_i32, %arg1 : i32, i32
  }
  func.func @transform_3(%arg0: i32, %arg1: i32, %arg2: i32) -> (i32, i32) {
    %c0_i32 = arith.constant 0 : i32
    return %arg0, %arg1 : i32, i32
  }
}

</mosaic_0001>

<llo_original>
// kernel: tpu_custom_call.1
$region0: #{tpu_custom_call.1}
  #allocation0 [shape = 'u32[]', space=smem, size = 0x4, offset = 0x4, fixed_abs, tag = 'smem constant byte address 0x4 - core index']
  #allocation1 [shape = 'u32[144,128]{1,0:T(1,128)}', space=vmem, size = 0x12000, scoped, tag = 'internal scratch']
  %s0 = inlined_call_operand.hbm [shape: bf16[512,384], index: 0, kind: input, shape index: {}]
  %s1 = inlined_call_operand.hbm [shape: bf16[384,128], index: 1, kind: input, shape index: {}]
  %s2 = inlined_call_operand.vmem [shape: f32[1,128], index: 2, kind: input, shape index: {}]
  %s3 = inlined_call_operand.hbm [shape: bf16[512,128], index: 3, kind: output, shape index: {}]
  %s4 = sld [smem:[#allocation0]]
  $region53: #{tpu_custom_call.1} parent=0
    _
  %s6 = ssub.s32 1, %s4
  %s7 = scalar_select 0, %s6, %s4
  $region1: #{tpu_custom_call.1} parent=0
    #allocation2 [shape = 'u8[393216]{0}', space=vmem, size = 0x60000, scoped, tag = 'input window, operand 0']
    #allocation3 [shape = 's32[2]{0}', space=sflag, size = 0x8, scoped, tag = 'scoped memory for tpu_custom_call.1']
    #allocation4 [shape = 's32[2]{0}', space=sflag, size = 0x8, scoped, tag = 'scoped memory for tpu_custom_call.1']
    #allocation5 [shape = 'u8[98304]{0}', space=vmem, size = 0x18000, scoped, tag = 'input window, operand 1, single buffered']
    #allocation6 [shape = 's32[1]{0}', space=sflag, size = 0x4, scoped, tag = 'scoped memory for tpu_custom_call.1']
    #allocation7 [shape = 'u8[131072]{0}', space=vmem, size = 0x20000, scoped, tag = 'output window, operand 0']
    %8 = vsyncpa [#allocation3], 0
    %s9 = scalar_lea.sflag [#allocation3], 1
    %10 = vsyncpa %s9, 0
    %11 = vsyncpa [#allocation6], 0
    %12 = vsyncpa [#allocation4], 0
    %s13 = scalar_lea.sflag [#allocation4], 1
    %14 = vsyncpa %s13, 0
    loop: start=0, step=1, limit=4
    $region2: #{tpu_custom_call.1} parent=1 // loop_pre_header
      _
    $region3: #{tpu_custom_call.1} parent=1 // loop_header
      %s16 = sphi 0, %s20
      %p17 = scmp.ge.s32.totalorder %s16, 4
      %s23 = sphi 0, %s42
      %s24 = sphi 0, %s38
      %s25 = sphi 0, %s34
      %s26 = sphi 0, %s23
      %s27 = sphi 0, %s24
      %s28 = sphi 0, %s25
      %s29 = sphi 0, %s26
      %s30 = sphi 0, %s27
      %s31 = sphi 0, %s28
      %s47 = sphi 0, %s49
      %s50 = sphi 0, %s47
      %s51 = sphi 0, %s50
      %s67 = sphi 0, %s51
      %s75 = sphi 0, %s77
      %s78 = sphi 0, %s75
      %s79 = sphi 0, %s78
      %s95 = sphi 0, %s79
      %s101 = sphi 0, %s103
      %s104 = sphi 0, %s101
      %s105 = sphi 0, %s104
      %s121 = sphi 0, %s105
      %s129 = sphi 0, %s131
      %s132 = sphi 0, %s129
      %s133 = sphi 0, %s132
      %s149 = sphi 0, %s133
    $region4: #{tpu_custom_call.1} parent=1 // loop_header_branch
      %19 = sbr.rel (%p17) target = $region8
    $region5: #{tpu_custom_call.1} parent=1 // loop_body
      %s21 = ssub.s32 %s16, 1
      %s22 = ssub.s32 %s16, 2
      %s32 = sadd.s32 1, %s25
      %p33 = scmp.ge.s32.totalorder %s32, 1
      %s34 = scalar_select %p33, 0, %s32
      %s35 = sadd.s32 1, %s24
      %s36 = scalar_select %p33, %s35, %s24
      %p37 = scmp.ge.s32.totalorder %s36, 1
      %s38 = scalar_select %p37, 0, %s36
      %s39 = sadd.s32 1, %s23
      %s40 = scalar_select %p37, %s39, %s23
      %p41 = scmp.ge.s32.totalorder %s40, 2
      %s42 = scalar_select %p41, 0, %s40
      %s43 = ssub.s32 %s23, %s42
      %s44 = ssub.s32 %s25, %s34
      %s45 = sor.u32 %s43, %s44
      %p46 = scmp.eq.s32.totalorder %s45, 0
      %s48 = sadd.s32 %s47, 1
      %s49 = scalar_select %p46, %s47, %s48
      %p52 = pneg %p46
      %p53 = scmp.eq.s32.totalorder %s16, 1
      %p54 = por %p52, %p53
      %p55 = scmp.ne.s32.totalorder %s47, %s50
      %p56 = scmp.eq.s32.totalorder %s16, 0
      %p57 = por %p55, %p56
      %p58 = scmp.ne.s32.totalorder %s47, %s50
      %p59 = scmp.eq.s32.totalorder %s21, 1
      %p60 = por %p58, %p59
      %p61 = scmp.ne.s32.totalorder %s50, %s51
      %p62 = scmp.eq.s32.totalorder %s21, 0
      %p63 = por %p61, %p62
      %p64 = scmp.ne.s32.totalorder %s50, %s51
      %p65 = scmp.eq.s32.totalorder %s22, 1
      %p66 = por %p64, %p65
      %p68 = scmp.ne.s32.totalorder %s51, %s67
      %p69 = scmp.eq.s32.totalorder %s22, 0
      %p70 = por %p68, %p69
      %s71 = ssub.s32 %s25, %s34
      %s72 = ssub.s32 %s24, %s38
      %s73 = sor.u32 %s71, %s72
      %p74 = scmp.eq.s32.totalorder %s73, 0
      %s76 = sadd.s32 %s75, 1
      %s77 = scalar_select %p74, %s75, %s76
      %p80 = pneg %p74
      %p81 = scmp.eq.s32.totalorder %s16, 1
      %p82 = por %p80, %p81
      %p83 = scmp.ne.s32.totalorder %s75, %s78
      %p84 = scmp.eq.s32.totalorder %s16, 0
      %p85 = por %p83, %p84
      %p86 = scmp.ne.s32.totalorder %s75, %s78
      %p87 = scmp.eq.s32.totalorder %s21, 1
      %p88 = por %p86, %p87
      %p89 = scmp.ne.s32.totalorder %s78, %s79
      %p90 = scmp.eq.s32.totalorder %s21, 0
      %p91 = por %p89, %p90
      %p92 = scmp.ne.s32.totalorder %s78, %s79
      %p93 = scmp.eq.s32.totalorder %s22, 1
      %p94 = por %p92, %p93
      %p96 = scmp.ne.s32.totalorder %s79, %s95
      %p97 = scmp.eq.s32.totalorder %s22, 0
      %p98 = por %p96, %p97
      %s99 = ssub.s32 %s24, %s38
      %p100 = scmp.eq.s32.totalorder %s99, 0
      %s102 = sadd.s32 %s101, 1
      %s103 = scalar_select %p100, %s101, %s102
      %p106 = pneg %p100
      %p107 = scmp.eq.s32.totalorder %s16, 1
      %p108 = por %p106, %p107
      %p109 = scmp.ne.s32.totalorder %s101, %s104
      %p110 = scmp.eq.s32.totalorder %s16, 0
      %p111 = por %p109, %p110
      %p112 = scmp.ne.s32.totalorder %s101, %s104
      %p113 = scmp.eq.s32.totalorder %s21, 1
      %p114 = por %p112, %p113
      %p115 = scmp.ne.s32.totalorder %s104, %s105
      %p116 = scmp.eq.s32.totalorder %s21, 0
      %p117 = por %p115, %p116
      %p118 = scmp.ne.s32.totalorder %s104, %s105
      %p119 = scmp.eq.s32.totalorder %s22, 1
      %p120 = por %p118, %p119
      %p122 = scmp.ne.s32.totalorder %s105, %s121
      %p123 = scmp.eq.s32.totalorder %s22, 0
      %p124 = por %p122, %p123
      %s125 = ssub.s32 %s23, %s42
      %s126 = ssub.s32 %s24, %s38
      %s127 = sor.u32 %s125, %s126
      %p128 = scmp.eq.s32.totalorder %s127, 0
      %s130 = sadd.s32 %s129, 1
      %s131 = scalar_select %p128, %s129, %s130
      %p134 = pneg %p128
      %p135 = scmp.eq.s32.totalorder %s16, 1
      %p136 = por %p134, %p135
      %p137 = scmp.ne.s32.totalorder %s129, %s132
      %p138 = scmp.eq.s32.totalorder %s16, 0
      %p139 = por %p137, %p138
      %p140 = scmp.ne.s32.totalorder %s129, %s132
      %p141 = scmp.eq.s32.totalorder %s21, 1
      %p142 = por %p140, %p141
      %p143 = scmp.ne.s32.totalorder %s132, %s133
      %p144 = scmp.eq.s32.totalorder %s21, 0
      %p145 = por %p143, %p144
      %p146 = scmp.ne.s32.totalorder %s132, %s133
      %p147 = scmp.eq.s32.totalorder %s22, 1
      %p148 = por %p146, %p147
      %p150 = scmp.ne.s32.totalorder %s133, %s149
      %p151 = scmp.eq.s32.totalorder %s22, 0
      %p152 = por %p150, %p151
      %p153 = scmp.le.s32.totalorder 1, %s16
      %p154 = scmp.lt.s32.totalorder %s16, 3
      %p155 = pnand %p153, %p154
      %p156 = pneg %p155
      // Predicated region
      $region9: #{tpu_custom_call.1} parent=5 // pred_check
        _
      $region10: #{tpu_custom_call.1} parent=5 // pred_check_branch
        %158 = sbr.rel (%p155) target = $region12
      $region11: #{tpu_custom_call.1} parent=5 // pred_region
        %s159 = ssub.s32 %s16, 1
        // Predicated region
        $region13: #{tpu_custom_call.1} parent=11 // pred_check
          %p160 = pneg %p91
        $region14: #{tpu_custom_call.1} parent=11 // pred_check_branch
          %162 = sbr.rel (%p160) target = $region16
        $region15: #{tpu_custom_call.1} parent=11 // pred_region
          %s163 = smul.u32 48, %s28
          %s165 = ssub.s32 3072, 3072
          %166 = vsyncadd [#allocation6], %s165
          %s167 = sadd.s32 %s27, %s163
          %s168 = smul.addr %s167, 64
          %s169 = scalar_lea.hbm %s1, %s168
          %s170 = sshll.u32 [#allocation5], 4
          %s171 = int_to_ptr.vmem [resolvable:$true] %s170
          %176 = dma.hbm_to_vmem [thread:$0]  %s169, 3072, %s171, [#allocation6], 64, 64, 4
        $region16: #{tpu_custom_call.1} parent=11 // pred_fallthru
          _
        // Predicated region
        $region17: #{tpu_custom_call.1} parent=11 // pred_check
          %p177 = pneg %p117
        $region18: #{tpu_custom_call.1} parent=11 // pred_check_branch
          %179 = sbr.rel (%p177) target = $region20
        $region19: #{tpu_custom_call.1} parent=11 // pred_region
          %p180 = scmp.lt.s32.totalorder %s27, 0
          %s181 = scalar_select %p180, %s27, 0
          %s182 = scalar_lea.vmem %s2, %s181
        $region20: #{tpu_custom_call.1} parent=11 // pred_fallthru
          _
      $region12: #{tpu_custom_call.1} parent=5 // pred_fallthru
        _
      %p183 = scmp.lt.s32.totalorder %s16, 2
      // Predicated region
      $region21: #{tpu_custom_call.1} parent=5 // pred_check
        %p184 = pneg %p183
      $region22: #{tpu_custom_call.1} parent=5 // pred_check_branch
        %186 = sbr.rel (%p184) target = $region24
      $region23: #{tpu_custom_call.1} parent=5 // pred_region
        // Predicated region
        $region25: #{tpu_custom_call.1} parent=23 // pred_check
          %p187 = pneg %p57
        $region26: #{tpu_custom_call.1} parent=23 // pred_check_branch
          %189 = sbr.rel (%p187) target = $region28
        $region27: #{tpu_custom_call.1} parent=23 // pred_region
          %s190 = sand.u32 %s47, 1
          %s191 = scalar_lea.sflag [#allocation3], %s190
          %s192 = sand.u32 %s47, 1
          %s193 = smul.addr %s192, 384
          %s194 = scalar_lea.vmem [#allocation2], %s193
          %s195 = smul.u32 32, %s23
          %s196 = smul.u32 3, %s25
          %s198 = ssub.s32 6144, 6144
          %199 = vsyncadd %s191, %s198
          %s200 = smul.addr %s195, 3
          %s201 = sadd.s32 %s196, %s200
          %s202 = smul.addr %s201, 64
          %s203 = scalar_lea.hbm %s0, %s202
          %s204 = sshll.u32 %s194, 4
          %s205 = int_to_ptr.vmem [resolvable:$true] %s204
          %210 = dma.hbm_to_vmem [thread:$0]  %s203, 6144, %s205, %s191, 192, 192, 12
        $region28: #{tpu_custom_call.1} parent=23 // pred_fallthru
          _
      $region24: #{tpu_custom_call.1} parent=5 // pred_fallthru
        _
      %p211 = scmp.le.s32.totalorder 1, %s16
      %p212 = scmp.lt.s32.totalorder %s16, 3
      %p213 = pnand %p211, %p212
      %p214 = pneg %p213
      // Predicated region
      $region29: #{tpu_custom_call.1} parent=5 // pred_check
        _
      $region30: #{tpu_custom_call.1} parent=5 // pred_check_branch
        %216 = sbr.rel (%p213) target = $region32
      $region31: #{tpu_custom_call.1} parent=5 // pred_region
        %s217 = ssub.s32 %s16, 1
        %s218 = sand.u32 %s50, 1
        %s219 = scalar_lea.sflag [#allocation3], %s218
        %s220 = sand.u32 %s50, 1
        %s221 = smul.addr %s220, 384
        %s222 = scalar_lea.vmem [#allocation2], %s221
        // Predicated region
        $region33: #{tpu_custom_call.1} parent=31 // pred_check
          %p223 = pneg %p63
        $region34: #{tpu_custom_call.1} parent=31 // pred_check_branch
          %225 = sbr.rel (%p223) target = $region36
        $region35: #{tpu_custom_call.1} parent=31 // pred_region
          %226 = dma.done %s219, 6144
        $region36: #{tpu_custom_call.1} parent=31 // pred_fallthru
          _
        // Predicated region
        $region37: #{tpu_custom_call.1} parent=31 // pred_check
          %p227 = pneg %p91
        $region38: #{tpu_custom_call.1} parent=31 // pred_check_branch
          %229 = sbr.rel (%p227) target = $region40
        $region39: #{tpu_custom_call.1} parent=31 // pred_region
          %230 = dma.done [#allocation6], 3072
        $region40: #{tpu_custom_call.1} parent=31 // pred_fallthru
          _
        %s231 = sand.u32 %s50, 1
        %s232 = scalar_lea.sflag [#allocation3], %s231
        %s233 = sand.u32 %s50, 1
        %s234 = smul.addr %s233, 384
        %s235 = scalar_lea.vmem [#allocation2], %s234
        %p236 = pneg %p63
        %p237 = pneg %p60
        %p238 = pneg %p91
        %p239 = pneg %p88
        %p240 = scmp.lt.s32.totalorder %s27, 0
        %s241 = scalar_select %p240, %s27, 0
        %s242 = scalar_lea.vmem %s2, %s241
        %p243 = pneg %p117
        %p244 = pneg %p114
        %p245 = pneg %p145
        %p246 = pneg %p142
        %s247 = sand.u32 %s132, 1
        %s248 = scalar_lea.sflag [#allocation4], %s247
        %s249 = sand.u32 %s132, 1
        %s250 = smul.addr %s249, 128
        %s251 = scalar_lea.vmem [#allocation7], %s250
        %s252 = smul.u32 32, %s26
        %s253 = smul.u32 3, %s28
        %s254 = smul.u32 48, %s28
        %p255 = scmp.lt.s32.totalorder %s27, 0
        %s256 = scalar_select %p255, %s27, 0
        %s257 = scalar_lea.vmem %s2, %s256
        %s258 = smul.u32 32, %s26
        %v260 = vld [vmem:[%s222] sm:$0xff]
        %v261 = vld [vmem:[%s222 + $0x8] sm:$0xf]
        %v262 = vld [vmem:[%s222 + $0xc] sm:$0xff]
        %v263 = vld [vmem:[%s222 + $0x14] sm:$0xf]
        %v264 = vld [vmem:[%s222 + $0x18] sm:$0xff]
        %v265 = vld [vmem:[%s222 + $0x20] sm:$0xf]
        %v266 = vld [vmem:[%s222 + $0x24] sm:$0xff]
        %v267 = vld [vmem:[%s222 + $0x2c] sm:$0xf]
        %v268 = vld [vmem:[%s222 + $0x30] sm:$0xff]
        %v269 = vld [vmem:[%s222 + $0x38] sm:$0xf]
        %v270 = vld [vmem:[%s222 + $0x3c] sm:$0xff]
        %v271 = vld [vmem:[%s222 + $0x44] sm:$0xf]
        %v272 = vld [vmem:[%s222 + $0x48] sm:$0xff]
        %v273 = vld [vmem:[%s222 + $0x50] sm:$0xf]
        %v274 = vld [vmem:[%s222 + $0x54] sm:$0xff]
        %v275 = vld [vmem:[%s222 + $0x5c] sm:$0xf]
        %v276 = vld [vmem:[%s222 + $0x60] sm:$0xff]
        %v277 = vld [vmem:[%s222 + $0x68] sm:$0xf]
        %v278 = vld [vmem:[%s222 + $0x6c] sm:$0xff]
        %v279 = vld [vmem:[%s222 + $0x74] sm:$0xf]
        %v280 = vld [vmem:[%s222 + $0x78] sm:$0xff]
        %v281 = vld [vmem:[%s222 + $0x80] sm:$0xf]
        %v282 = vld [vmem:[%s222 + $0x84] sm:$0xff]
        %v283 = vld [vmem:[%s222 + $0x8c] sm:$0xf]
        %v284 = vld [vmem:[%s222 + $0x90] sm:$0xff]
        %v285 = vld [vmem:[%s222 + $0x98] sm:$0xf]
        %v286 = vld [vmem:[%s222 + $0x9c] sm:$0xff]
        %v287 = vld [vmem:[%s222 + $0xa4] sm:$0xf]
        %v288 = vld [vmem:[%s222 + $0xa8] sm:$0xff]
        %v289 = vld [vmem:[%s222 + $0xb0] sm:$0xf]
        %v290 = vld [vmem:[%s222 + $0xb4] sm:$0xff]
        %v291 = vld [vmem:[%s222 + $0xbc] sm:$0xf]
        %v292 = vld [vmem:[%s222 + $0xc0] sm:$0xff]
        %v293 = vld [vmem:[%s222 + $0xc8] sm:$0xf]
        %v294 = vld [vmem:[%s222 + $0xcc] sm:$0xff]
        %v295 = vld [vmem:[%s222 + $0xd4] sm:$0xf]
        %v296 = vld [vmem:[%s222 + $0xd8] sm:$0xff]
        %v297 = vld [vmem:[%s222 + $0xe0] sm:$0xf]
        %v298 = vld [vmem:[%s222 + $0xe4] sm:$0xff]
        %v299 = vld [vmem:[%s222 + $0xec] sm:$0xf]
        %v300 = vld [vmem:[%s222 + $0xf0] sm:$0xff]
        %v301 = vld [vmem:[%s222 + $0xf8] sm:$0xf]
        %v302 = vld [vmem:[%s222 + $0xfc] sm:$0xff]
        %v303 = vld [vmem:[%s222 + $0x104] sm:$0xf]
        %v304 = vld [vmem:[%s222 + $0x108] sm:$0xff]
        %v305 = vld [vmem:[%s222 + $0x110] sm:$0xf]
        %v306 = vld [vmem:[%s222 + $0x114] sm:$0xff]
        %v307 = vld [vmem:[%s222 + $0x11c] sm:$0xf]
        %v308 = vld [vmem:[%s222 + $0x120] sm:$0xff]
        %v309 = vld [vmem:[%s222 + $0x128] sm:$0xf]
        %v310 = vld [vmem:[%s222 + $0x12c] sm:$0xff]
        %v311 = vld [vmem:[%s222 + $0x134] sm:$0xf]
        %v312 = vld [vmem:[%s222 + $0x138] sm:$0xff]
        %v313 = vld [vmem:[%s222 + $0x140] sm:$0xf]
        %v314 = vld [vmem:[%s222 + $0x144] sm:$0xff]
        %v315 = vld [vmem:[%s222 + $0x14c] sm:$0xf]
        %v316 = vld [vmem:[%s222 + $0x150] sm:$0xff]
        %v317 = vld [vmem:[%s222 + $0x158] sm:$0xf]
        %v318 = vld [vmem:[%s222 + $0x15c] sm:$0xff]
        %v319 = vld [vmem:[%s222 + $0x164] sm:$0xf]
        %v320 = vld [vmem:[%s222 + $0x168] sm:$0xff]
        %v321 = vld [vmem:[%s222 + $0x170] sm:$0xf]
        %v322 = vld [vmem:[%s222 + $0x174] sm:$0xff]
        %v323 = vld [vmem:[%s222 + $0x17c] sm:$0xf]
        %v324 = vld [vmem:[#allocation5] sm:$0xf]
        %v325 = vld [vmem:[#allocation5 + $0x4] sm:$0xf]
        %v326 = vld [vmem:[#allocation5 + $0x8] sm:$0xf]
        %v327 = vld [vmem:[#allocation5 + $0xc] sm:$0xf]
        %v328 = vld [vmem:[#allocation5 + $0x10] sm:$0xf]
        %v329 = vld [vmem:[#allocation5 + $0x14] sm:$0xf]
        %v330 = vld [vmem:[#allocation5 + $0x18] sm:$0xf]
        %v331 = vld [vmem:[#allocation5 + $0x1c] sm:$0xf]
        %v332 = vld [vmem:[#allocation5 + $0x20] sm:$0xf]
        %v333 = vld [vmem:[#allocation5 + $0x24] sm:$0xf]
        %v334 = vld [vmem:[#allocation5 + $0x28] sm:$0xf]
        %v335 = vld [vmem:[#allocation5 + $0x2c] sm:$0xf]
        %v336 = vld [vmem:[#allocation5 + $0x30] sm:$0xf]
        %v337 = vld [vmem:[#allocation5 + $0x34] sm:$0xf]
        %v338 = vld [vmem:[#allocation5 + $0x38] sm:$0xf]
        %v339 = vld [vmem:[#allocation5 + $0x3c] sm:$0xf]
        %v340 = vld [vmem:[#allocation5 + $0x40] sm:$0xf]
        %v341 = vld [vmem:[#allocation5 + $0x44] sm:$0xf]
        %v342 = vld [vmem:[#allocation5 + $0x48] sm:$0xf]
        %v343 = vld [vmem:[#allocation5 + $0x4c] sm:$0xf]
        %v344 = vld [vmem:[#allocation5 + $0x50] sm:$0xf]
        %v345 = vld [vmem:[#allocation5 + $0x54] sm:$0xf]
        %v346 = vld [vmem:[#allocation5 + $0x58] sm:$0xf]
        %v347 = vld [vmem:[#allocation5 + $0x5c] sm:$0xf]
        %v348 = vld [vmem:[#allocation5 + $0x60] sm:$0xf]
        %v349 = vld [vmem:[#allocation5 + $0x64] sm:$0xf]
        %v350 = vld [vmem:[#allocation5 + $0x68] sm:$0xf]
        %v351 = vld [vmem:[#allocation5 + $0x6c] sm:$0xf]
        %v352 = vld [vmem:[#allocation5 + $0x70] sm:$0xf]
        %v353 = vld [vmem:[#allocation5 + $0x74] sm:$0xf]
        %v354 = vld [vmem:[#allocation5 + $0x78] sm:$0xf]
        %v355 = vld [vmem:[#allocation5 + $0x7c] sm:$0xf]
        %v356 = vld [vmem:[#allocation5 + $0x80] sm:$0xf]
        %v357 = vld [vmem:[#allocation5 + $0x84] sm:$0xf]
        %v358 = vld [vmem:[#allocation5 + $0x88] sm:$0xf]
        %v359 = vld [vmem:[#allocation5 + $0x8c] sm:$0xf]
        %v360 = vld [vmem:[#allocation5 + $0x90] sm:$0xf]
        %v361 = vld [vmem:[#allocation5 + $0x94] sm:$0xf]
        %v362 = vld [vmem:[#allocation5 + $0x98] sm:$0xf]
        %v363 = vld [vmem:[#allocation5 + $0x9c] sm:$0xf]
        %v364 = vld [vmem:[#allocation5 + $0xa0] sm:$0xf]
        %v365 = vld [vmem:[#allocation5 + $0xa4] sm:$0xf]
        %v366 = vld [vmem:[#allocation5 + $0xa8] sm:$0xf]
        %v367 = vld [vmem:[#allocation5 + $0xac] sm:$0xf]
        %v368 = vld [vmem:[#allocation5 + $0xb0] sm:$0xf]
        %v369 = vld [vmem:[#allocation5 + $0xb4] sm:$0xf]
        %v370 = vld [vmem:[#allocation5 + $0xb8] sm:$0xf]
        %v371 = vld [vmem:[#allocation5 + $0xbc] sm:$0xf]
        %v372 = vld [vmem:[%s257] sm:$0x1]
        %v374 = vlaneseq
        %v375 = vshrl.u32 %v374, 7
        %v376 = vsub.s32 0, %v375
        %v377 = vrot.slane %v372, %v376
        %v443 = vunpack.c.l.b16 %v260
        %v444 = vunpack.c.h.b16 %v260
        %v445 = vunpack.c.l.b16 %v261
        %v446 = vunpack.c.l.b16 %v262
        %v447 = vunpack.c.h.b16 %v262
        %v448 = vunpack.c.l.b16 %v263
        %v449 = vunpack.c.l.b16 %v264
        %v450 = vunpack.c.h.b16 %v264
        %v451 = vunpack.c.l.b16 %v265
        %v452 = vunpack.c.l.b16 %v266
        %v453 = vunpack.c.h.b16 %v266
        %v454 = vunpack.c.l.b16 %v267
        %v455 = vunpack.c.l.b16 %v268
        %v456 = vunpack.c.h.b16 %v268
        %v457 = vunpack.c.l.b16 %v269
        %v458 = vunpack.c.l.b16 %v270
        %v459 = vunpack.c.h.b16 %v270
        %v460 = vunpack.c.l.b16 %v271
        %v461 = vunpack.c.l.b16 %v272
        %v462 = vunpack.c.h.b16 %v272
        %v463 = vunpack.c.l.b16 %v273
        %v464 = vunpack.c.l.b16 %v274
        %v465 = vunpack.c.h.b16 %v274
        %v466 = vunpack.c.l.b16 %v275
        %v467 = vunpack.c.l.b16 %v276
        %v468 = vunpack.c.h.b16 %v276
        %v469 = vunpack.c.l.b16 %v277
        %v470 = vunpack.c.l.b16 %v278
        %v471 = vunpack.c.h.b16 %v278
        %v472 = vunpack.c.l.b16 %v279
        %v473 = vunpack.c.l.b16 %v280
        %v474 = vunpack.c.h.b16 %v280
        %v475 = vunpack.c.l.b16 %v281
        %v476 = vunpack.c.l.b16 %v282
        %v477 = vunpack.c.h.b16 %v282
        %v478 = vunpack.c.l.b16 %v283
        %v479 = vunpack.c.l.b16 %v284
        %v480 = vunpack.c.h.b16 %v284
        %v481 = vunpack.c.l.b16 %v285
        %v482 = vunpack.c.l.b16 %v286
        %v483 = vunpack.c.h.b16 %v286
        %v484 = vunpack.c.l.b16 %v287
        %v485 = vunpack.c.l.b16 %v288
        %v486 = vunpack.c.h.b16 %v288
        %v487 = vunpack.c.l.b16 %v289
        %v488 = vunpack.c.l.b16 %v290
        %v489 = vunpack.c.h.b16 %v290
        %v490 = vunpack.c.l.b16 %v291
        %v491 = vunpack.c.l.b16 %v292
        %v492 = vunpack.c.h.b16 %v292
        %v493 = vunpack.c.l.b16 %v293
        %v494 = vunpack.c.l.b16 %v294
        %v495 = vunpack.c.h.b16 %v294
        %v496 = vunpack.c.l.b16 %v295
        %v497 = vunpack.c.l.b16 %v296
        %v498 = vunpack.c.h.b16 %v296
        %v499 = vunpack.c.l.b16 %v297
        %v500 = vunpack.c.l.b16 %v298
        %v501 = vunpack.c.h.b16 %v298
        %v502 = vunpack.c.l.b16 %v299
        %v503 = vunpack.c.l.b16 %v300
        %v504 = vunpack.c.h.b16 %v300
        %v505 = vunpack.c.l.b16 %v301
        %v506 = vunpack.c.l.b16 %v302
        %v507 = vunpack.c.h.b16 %v302
        %v508 = vunpack.c.l.b16 %v303
        %v509 = vunpack.c.l.b16 %v304
        %v510 = vunpack.c.h.b16 %v304
        %v511 = vunpack.c.l.b16 %v305
        %v512 = vunpack.c.l.b16 %v306
        %v513 = vunpack.c.h.b16 %v306
        %v514 = vunpack.c.l.b16 %v307
        %v515 = vunpack.c.l.b16 %v308
        %v516 = vunpack.c.h.b16 %v308
        %v517 = vunpack.c.l.b16 %v309
        %v518 = vunpack.c.l.b16 %v310
        %v519 = vunpack.c.h.b16 %v310
        %v520 = vunpack.c.l.b16 %v311
        %v521 = vunpack.c.l.b16 %v312
        %v522 = vunpack.c.h.b16 %v312
        %v523 = vunpack.c.l.b16 %v313
        %v524 = vunpack.c.l.b16 %v314
        %v525 = vunpack.c.h.b16 %v314
        %v526 = vunpack.c.l.b16 %v315
        %v527 = vunpack.c.l.b16 %v316
        %v528 = vunpack.c.h.b16 %v316
        %v529 = vunpack.c.l.b16 %v317
        %v530 = vunpack.c.l.b16 %v318
        %v531 = vunpack.c.h.b16 %v318
        %v532 = vunpack.c.l.b16 %v319
        %v533 = vunpack.c.l.b16 %v320
        %v534 = vunpack.c.h.b16 %v320
        %v535 = vunpack.c.l.b16 %v321
        %v536 = vunpack.c.l.b16 %v322
        %v537 = vunpack.c.h.b16 %v322
        %v538 = vunpack.c.l.b16 %v323
        %v539 = vpack.c.b16 %v446, %v443
        %v540 = vpack.c.b16 %v447, %v444
        %v541 = vpack.c.b16 %v448, %v445
        %v542 = vpack.c.b16 %v452, %v449
        %v543 = vpack.c.b16 %v453, %v450
        %v544 = vpack.c.b16 %v454, %v451
        %v545 = vpack.c.b16 %v458, %v455
        %v546 = vpack.c.b16 %v459, %v456
        %v547 = vpack.c.b16 %v460, %v457
        %v548 = vpack.c.b16 %v464, %v461
        %v549 = vpack.c.b16 %v465, %v462
        %v550 = vpack.c.b16 %v466, %v463
        %v551 = vpack.c.b16 %v470, %v467
        %v552 = vpack.c.b16 %v471, %v468
        %v553 = vpack.c.b16 %v472, %v469
        %v554 = vpack.c.b16 %v476, %v473
        %v555 = vpack.c.b16 %v477, %v474
        %v556 = vpack.c.b16 %v478, %v475
        %v557 = vpack.c.b16 %v482, %v479
        %v558 = vpack.c.b16 %v483, %v480
        %v559 = vpack.c.b16 %v484, %v481
        %v560 = vpack.c.b16 %v488, %v485
        %v561 = vpack.c.b16 %v489, %v486
        %v562 = vpack.c.b16 %v490, %v487
        %v563 = vpack.c.b16 %v494, %v491
        %v564 = vpack.c.b16 %v495, %v492
        %v565 = vpack.c.b16 %v496, %v493
        %v566 = vpack.c.b16 %v500, %v497
        %v567 = vpack.c.b16 %v501, %v498
        %v568 = vpack.c.b16 %v502, %v499
        %v569 = vpack.c.b16 %v506, %v503
        %v570 = vpack.c.b16 %v507, %v504
        %v571 = vpack.c.b16 %v508, %v505
        %v572 = vpack.c.b16 %v512, %v509
        %v573 = vpack.c.b16 %v513, %v510
        %v574 = vpack.c.b16 %v514, %v511
        %v575 = vpack.c.b16 %v518, %v515
        %v576 = vpack.c.b16 %v519, %v516
        %v577 = vpack.c.b16 %v520, %v517
        %v578 = vpack.c.b16 %v524, %v521
        %v579 = vpack.c.b16 %v525, %v522
        %v580 = vpack.c.b16 %v526, %v523
        %v581 = vpack.c.b16 %v530, %v527
        %v582 = vpack.c.b16 %v531, %v528
        %v583 = vpack.c.b16 %v532, %v529
        %v584 = vpack.c.b16 %v536, %v533
        %v585 = vpack.c.b16 %v537, %v534
        %v586 = vpack.c.b16 %v538, %v535
        %v683 = vunpack.c.l.b16 %v324
        %v684 = vunpack.c.l.b16 %v325
        %v685 = vunpack.c.l.b16 %v326
        %v686 = vunpack.c.l.b16 %v327
        %v687 = vunpack.c.l.b16 %v328
        %v688 = vunpack.c.l.b16 %v329
        %v689 = vunpack.c.l.b16 %v330
        %v690 = vunpack.c.l.b16 %v331
        %v691 = vunpack.c.l.b16 %v332
        %v692 = vunpack.c.l.b16 %v333
        %v693 = vunpack.c.l.b16 %v334
        %v694 = vunpack.c.l.b16 %v335
        %v695 = vunpack.c.l.b16 %v336
        %v696 = vunpack.c.l.b16 %v337
        %v697 = vunpack.c.l.b16 %v338
        %v698 = vunpack.c.l.b16 %v339
        %v699 = vunpack.c.l.b16 %v340
        %v700 = vunpack.c.l.b16 %v341
        %v701 = vunpack.c.l.b16 %v342
        %v702 = vunpack.c.l.b16 %v343
        %v703 = vunpack.c.l.b16 %v344
        %v704 = vunpack.c.l.b16 %v345
        %v705 = vunpack.c.l.b16 %v346
        %v706 = vunpack.c.l.b16 %v347
        %v707 = vunpack.c.l.b16 %v348
        %v708 = vunpack.c.l.b16 %v349
        %v709 = vunpack.c.l.b16 %v350
        %v710 = vunpack.c.l.b16 %v351
        %v711 = vunpack.c.l.b16 %v352
        %v712 = vunpack.c.l.b16 %v353
        %v713 = vunpack.c.l.b16 %v354
        %v714 = vunpack.c.l.b16 %v355
        %v715 = vunpack.c.l.b16 %v356
        %v716 = vunpack.c.l.b16 %v357
        %v717 = vunpack.c.l.b16 %v358
        %v718 = vunpack.c.l.b16 %v359
        %v719 = vunpack.c.l.b16 %v360
        %v720 = vunpack.c.l.b16 %v361
        %v721 = vunpack.c.l.b16 %v362
        %v722 = vunpack.c.l.b16 %v363
        %v723 = vunpack.c.l.b16 %v364
        %v724 = vunpack.c.l.b16 %v365
        %v725 = vunpack.c.l.b16 %v366
        %v726 = vunpack.c.l.b16 %v367
        %v727 = vunpack.c.l.b16 %v368
        %v728 = vunpack.c.l.b16 %v369
        %v729 = vunpack.c.l.b16 %v370
        %v730 = vunpack.c.l.b16 %v371
        %v731 = vpack.c.b16 %v684, %v683
        %v732 = vpack.c.b16 %v686, %v685
        %v733 = vpack.c.b16 %v688, %v687
        %v734 = vpack.c.b16 %v690, %v689
        %v735 = vpack.c.b16 %v692, %v691
        %v736 = vpack.c.b16 %v694, %v693
        %v737 = vpack.c.b16 %v696, %v695
        %v738 = vpack.c.b16 %v698, %v697
        %v739 = vpack.c.b16 %v700, %v699
        %v740 = vpack.c.b16 %v702, %v701
        %v741 = vpack.c.b16 %v704, %v703
        %v742 = vpack.c.b16 %v706, %v705
        %v743 = vpack.c.b16 %v708, %v707
        %v744 = vpack.c.b16 %v710, %v709
        %v745 = vpack.c.b16 %v712, %v711
        %v746 = vpack.c.b16 %v714, %v713
        %v747 = vpack.c.b16 %v716, %v715
        %v748 = vpack.c.b16 %v718, %v717
        %v749 = vpack.c.b16 %v720, %v719
        %v750 = vpack.c.b16 %v722, %v721
        %v751 = vpack.c.b16 %v724, %v723
        %v752 = vpack.c.b16 %v726, %v725
        %v753 = vpack.c.b16 %v728, %v727
        %v754 = vpack.c.b16 %v730, %v729
        %779 = vmatprep.subr.bf16.mxu0 0
        %780 = vmatpush1.bf16.msra.mxu0 %v738
        %781 = vmatprep.subr.bf16.mxu0 0
        %782 = vmatpush1.bf16.msra.mxu0 %v737
        %783 = vmatprep.subr.bf16.mxu0 0
        %784 = vmatpush1.bf16.msra.mxu0 %v736
        %785 = vmatprep.subr.bf16.mxu0 0
        %786 = vmatpush1.bf16.msra.mxu0 %v735
        %787 = vmatprep.subr.bf16.mxu0 0
        %788 = vmatpush1.bf16.msra.mxu0 %v734
        %789 = vmatprep.subr.bf16.mxu0 0
        %790 = vmatpush1.bf16.msra.mxu0 %v733
        %791 = vmatprep.subr.bf16.mxu0 0
        %792 = vmatpush1.bf16.msra.mxu0 %v732
        %793 = vmatprep.subr.bf16.mxu0 0
        %794 = vmatpush1.bf16.msra.mxu0 %v731
        %795 = vmatprep.subr.bf16.mxu0 0
        %796 = vmatpush2.bf16.msra.mxu0 %v746
        %797 = vmatprep.subr.bf16.mxu0 0
        %798 = vmatpush2.bf16.msra.mxu0 %v745
        %799 = vmatprep.subr.bf16.mxu0 0
        %800 = vmatpush2.bf16.msra.mxu0 %v744
        %801 = vmatprep.subr.bf16.mxu0 0
        %802 = vmatpush2.bf16.msra.mxu0 %v743
        %803 = vmatprep.subr.bf16.mxu0 0
        %804 = vmatpush2.bf16.msra.mxu0 %v742
        %805 = vmatprep.subr.bf16.mxu0 0
        %806 = vmatpush2.bf16.msra.mxu0 %v741
        %807 = vmatprep.subr.bf16.mxu0 0
        %808 = vmatpush2.bf16.msra.mxu0 %v740
        %809 = vmatprep.subr.bf16.mxu0 0
        %810 = vmatpush2.bf16.msra.mxu0 %v739
        %811 = vmatprep.mubr.bf16.mxu0 %v540
        %812 = vmatmul.mubr.bf16.gmra.mxu0 %v539
        %v813 = vpop.f32.mrf.mxu0
        %v814 = vadd.f32 %v377, %v813
        %v815 = vpop.f32.mrf.mxu0
        %v816 = vpop.f32.mrf.mxu0
        %v817 = vadd.f32 %v377, %v816
        %v818 = vpop.f32.mrf.mxu0
        %819 = vmatprep.mubr.bf16.mxu0 %v543
        %820 = vmatmul.mubr.bf16.gmra.mxu0 %v542
        %v821 = vpop.f32.mrf.mxu0
        %v822 = vadd.f32 %v377, %v821
        %v823 = vpop.f32.mrf.mxu0
        %v824 = vpop.f32.mrf.mxu0
        %v825 = vadd.f32 %v377, %v824
        %v826 = vpop.f32.mrf.mxu0
        %827 = vmatprep.mubr.bf16.mxu0 %v546
        %828 = vmatmul.mubr.bf16.gmra.mxu0 %v545
        %v829 = vpop.f32.mrf.mxu0
        %v830 = vadd.f32 %v377, %v829
        %v831 = vpop.f32.mrf.mxu0
        %v832 = vpop.f32.mrf.mxu0
        %v833 = vadd.f32 %v377, %v832
        %v834 = vpop.f32.mrf.mxu0
        %835 = vmatprep.mubr.bf16.mxu0 %v549
        %836 = vmatmul.mubr.bf16.gmra.mxu0 %v548
        %v837 = vpop.f32.mrf.mxu0
        %v838 = vadd.f32 %v377, %v837
        %v839 = vpop.f32.mrf.mxu0
        %v840 = vpop.f32.mrf.mxu0
        %v841 = vadd.f32 %v377, %v840
        %v842 = vpop.f32.mrf.mxu0
        %843 = vmatprep.mubr.bf16.mxu0 %v552
        %844 = vmatmul.mubr.bf16.gmra.mxu0 %v551
        %v845 = vpop.f32.mrf.mxu0
        %v846 = vadd.f32 %v377, %v845
        %v847 = vpop.f32.mrf.mxu0
        %v848 = vpop.f32.mrf.mxu0
        %v849 = vadd.f32 %v377, %v848
        %v850 = vpop.f32.mrf.mxu0
        %851 = vmatprep.mubr.bf16.mxu0 %v555
        %852 = vmatmul.mubr.bf16.gmra.mxu0 %v554
        %v853 = vpop.f32.mrf.mxu0
        %v854 = vadd.f32 %v377, %v853
        %v855 = vpop.f32.mrf.mxu0
        %v856 = vpop.f32.mrf.mxu0
        %v857 = vadd.f32 %v377, %v856
        %v858 = vpop.f32.mrf.mxu0
        %859 = vmatprep.mubr.bf16.mxu0 %v558
        %860 = vmatmul.mubr.bf16.gmra.mxu0 %v557
        %v861 = vpop.f32.mrf.mxu0
        %v862 = vadd.f32 %v377, %v861
        %v863 = vpop.f32.mrf.mxu0
        %v864 = vpop.f32.mrf.mxu0
        %v865 = vadd.f32 %v377, %v864
        %v866 = vpop.f32.mrf.mxu0
        %867 = vmatprep.mubr.bf16.mxu0 %v561
        %868 = vmatmul.mubr.bf16.gmra.mxu0 %v560
        %v869 = vpop.f32.mrf.mxu0
        %v870 = vadd.f32 %v377, %v869
        %v871 = vpop.f32.mrf.mxu0
        %v872 = vpop.f32.mrf.mxu0
        %v873 = vadd.f32 %v377, %v872
        %v874 = vpop.f32.mrf.mxu0
        %875 = vmatprep.mubr.bf16.mxu0 %v564
        %876 = vmatmul.mubr.bf16.gmra.mxu0 %v563
        %v877 = vpop.f32.mrf.mxu0
        %v878 = vadd.f32 %v377, %v877
        %v879 = vpop.f32.mrf.mxu0
        %v880 = vpop.f32.mrf.mxu0
        %v881 = vadd.f32 %v377, %v880
        %v882 = vpop.f32.mrf.mxu0
        %883 = vmatprep.mubr.bf16.mxu0 %v567
        %884 = vmatmul.mubr.bf16.gmra.mxu0 %v566
        %v885 = vpop.f32.mrf.mxu0
        %v886 = vadd.f32 %v377, %v885
        %v887 = vpop.f32.mrf.mxu0
        %v888 = vpop.f32.mrf.mxu0
        %v889 = vadd.f32 %v377, %v888
        %v890 = vpop.f32.mrf.mxu0
        %891 = vmatprep.mubr.bf16.mxu0 %v570
        %892 = vmatmul.mubr.bf16.gmra.mxu0 %v569
        %v893 = vpop.f32.mrf.mxu0
        %v894 = vadd.f32 %v377, %v893
        %v895 = vpop.f32.mrf.mxu0
        %v896 = vpop.f32.mrf.mxu0
        %v897 = vadd.f32 %v377, %v896
        %v898 = vpop.f32.mrf.mxu0
        %899 = vmatprep.mubr.bf16.mxu0 %v573
        %900 = vmatmul.mubr.bf16.gmra.mxu0 %v572
        %v901 = vpop.f32.mrf.mxu0
        %v902 = vadd.f32 %v377, %v901
        %v903 = vpop.f32.mrf.mxu0
        %v904 = vpop.f32.mrf.mxu0
        %v905 = vadd.f32 %v377, %v904
        %v906 = vpop.f32.mrf.mxu0
        %907 = vmatprep.mubr.bf16.mxu0 %v576
        %908 = vmatmul.mubr.bf16.gmra.mxu0 %v575
        %v909 = vpop.f32.mrf.mxu0
        %v910 = vadd.f32 %v377, %v909
        %v911 = vpop.f32.mrf.mxu0
        %v912 = vpop.f32.mrf.mxu0
        %v913 = vadd.f32 %v377, %v912
        %v914 = vpop.f32.mrf.mxu0
        %915 = vmatprep.mubr.bf16.mxu0 %v579
        %916 = vmatmul.mubr.bf16.gmra.mxu0 %v578
        %v917 = vpop.f32.mrf.mxu0
        %v918 = vadd.f32 %v377, %v917
        %v919 = vpop.f32.mrf.mxu0
        %v920 = vpop.f32.mrf.mxu0
        %v921 = vadd.f32 %v377, %v920
        %v922 = vpop.f32.mrf.mxu0
        %923 = vmatprep.mubr.bf16.mxu0 %v582
        %924 = vmatmul.mubr.bf16.gmra.mxu0 %v581
        %v925 = vpop.f32.mrf.mxu0
        %v926 = vadd.f32 %v377, %v925
        %v927 = vpop.f32.mrf.mxu0
        %v928 = vpop.f32.mrf.mxu0
        %v929 = vadd.f32 %v377, %v928
        %v930 = vpop.f32.mrf.mxu0
        %931 = vmatprep.mubr.bf16.mxu0 %v585
        %932 = vmatmul.mubr.bf16.gmra.mxu0 %v584
        %v933 = vpop.f32.mrf.mxu0
        %v934 = vadd.f32 %v377, %v933
        %v935 = vpop.f32.mrf.mxu0
        %v936 = vpop.f32.mrf.mxu0
        %v937 = vadd.f32 %v377, %v936
        %v938 = vpop.f32.mrf.mxu0
        %939 = vdwg.mxu0
        %940 = vmatprep.subr.bf16.mxu0 0
        %941 = vmatpush1.bf16.msra.mxu0 %v754
        %942 = vmatprep.subr.bf16.mxu0 0
        %943 = vmatpush1.bf16.msra.mxu0 %v753
        %944 = vmatprep.subr.bf16.mxu0 0
        %945 = vmatpush1.bf16.msra.mxu0 %v752
        %946 = vmatprep.subr.bf16.mxu0 0
        %947 = vmatpush1.bf16.msra.mxu0 %v751
        %948 = vmatprep.subr.bf16.mxu0 0
        %949 = vmatpush1.bf16.msra.mxu0 %v750
        %950 = vmatprep.subr.bf16.mxu0 0
        %951 = vmatpush1.bf16.msra.mxu0 %v749
        %952 = vmatprep.subr.bf16.mxu0 0
        %953 = vmatpush1.bf16.msra.mxu0 %v748
        %954 = vmatprep.subr.bf16.mxu0 0
        %955 = vmatpush1.bf16.msra.mxu0 %v747
        %956 = vmatprep.subr.bf16.mxu0 0
        %957 = vmatpush2.bf16.msra.mxu0 0
        %958 = vmatprep.subr.bf16.mxu0 0
        %959 = vmatpush2.bf16.msra.mxu0 0
        %960 = vmatprep.subr.bf16.mxu0 0
        %961 = vmatpush2.bf16.msra.mxu0 0
        %962 = vmatprep.subr.bf16.mxu0 0
        %963 = vmatpush2.bf16.msra.mxu0 0
        %964 = vmatprep.subr.bf16.mxu0 0
        %965 = vmatpush2.bf16.msra.mxu0 0
        %966 = vmatprep.subr.bf16.mxu0 0
        %967 = vmatpush2.bf16.msra.mxu0 0
        %968 = vmatprep.subr.bf16.mxu0 0
        %969 = vmatpush2.bf16.msra.mxu0 0
        %970 = vmatprep.subr.bf16.mxu0 0
        %971 = vmatpush2.bf16.msra.mxu0 0
        %972 = vmatprep.mubr.bf16.mxu0 0
        %973 = vmatmul.mubr.bf16.gmra.mxu0 %v541
        %v974 = vpop.f32.mrf.mxu0
        %v975 = vadd.f32 %v814, %v974
        %v976 = vpop.f32.mrf.mxu0
        %v977 = vpop.f32.mrf.mxu0
        %v978 = vadd.f32 %v817, %v977
        %v979 = vpop.f32.mrf.mxu0
        %980 = vmatprep.mubr.bf16.mxu0 0
        %981 = vmatmul.mubr.bf16.gmra.mxu0 %v544
        %v982 = vpop.f32.mrf.mxu0
        %v983 = vadd.f32 %v822, %v982
        %v984 = vpop.f32.mrf.mxu0
        %v985 = vpop.f32.mrf.mxu0
        %v986 = vadd.f32 %v825, %v985
        %v987 = vpop.f32.mrf.mxu0
        %988 = vmatprep.mubr.bf16.mxu0 0
        %989 = vmatmul.mubr.bf16.gmra.mxu0 %v547
        %v990 = vpop.f32.mrf.mxu0
        %v991 = vadd.f32 %v830, %v990
        %v992 = vpop.f32.mrf.mxu0
        %v993 = vpop.f32.mrf.mxu0
        %v994 = vadd.f32 %v833, %v993
        %v995 = vpop.f32.mrf.mxu0
        %996 = vmatprep.mubr.bf16.mxu0 0
        %997 = vmatmul.mubr.bf16.gmra.mxu0 %v550
        %v998 = vpop.f32.mrf.mxu0
        %v999 = vadd.f32 %v838, %v998
        %v1000 = vpop.f32.mrf.mxu0
        %v1001 = vpop.f32.mrf.mxu0
        %v1002 = vadd.f32 %v841, %v1001
        %v1003 = vpop.f32.mrf.mxu0
        %1004 = vmatprep.mubr.bf16.mxu0 0
        %1005 = vmatmul.mubr.bf16.gmra.mxu0 %v553
        %v1006 = vpop.f32.mrf.mxu0
        %v1007 = vadd.f32 %v846, %v1006
        %v1008 = vpop.f32.mrf.mxu0
        %v1009 = vpop.f32.mrf.mxu0
        %v1010 = vadd.f32 %v849, %v1009
        %v1011 = vpop.f32.mrf.mxu0
        %1012 = vmatprep.mubr.bf16.mxu0 0
        %1013 = vmatmul.mubr.bf16.gmra.mxu0 %v556
        %v1014 = vpop.f32.mrf.mxu0
        %v1015 = vadd.f32 %v854, %v1014
        %v1016 = vpop.f32.mrf.mxu0
        %v1017 = vpop.f32.mrf.mxu0
        %v1018 = vadd.f32 %v857, %v1017
        %v1019 = vpop.f32.mrf.mxu0
        %1020 = vmatprep.mubr.bf16.mxu0 0
        %1021 = vmatmul.mubr.bf16.gmra.mxu0 %v559
        %v1022 = vpop.f32.mrf.mxu0
        %v1023 = vadd.f32 %v862, %v1022
        %v1024 = vpop.f32.mrf.mxu0
        %v1025 = vpop.f32.mrf.mxu0
        %v1026 = vadd.f32 %v865, %v1025
        %v1027 = vpop.f32.mrf.mxu0
        %1028 = vmatprep.mubr.bf16.mxu0 0
        %1029 = vmatmul.mubr.bf16.gmra.mxu0 %v562
        %v1030 = vpop.f32.mrf.mxu0
        %v1031 = vadd.f32 %v870, %v1030
        %v1032 = vpop.f32.mrf.mxu0
        %v1033 = vpop.f32.mrf.mxu0
        %v1034 = vadd.f32 %v873, %v1033
        %v1035 = vpop.f32.mrf.mxu0
        %1036 = vmatprep.mubr.bf16.mxu0 0
        %1037 = vmatmul.mubr.bf16.gmra.mxu0 %v565
        %v1038 = vpop.f32.mrf.mxu0
        %v1039 = vadd.f32 %v878, %v1038
        %v1040 = vpop.f32.mrf.mxu0
        %v1041 = vpop.f32.mrf.mxu0
        %v1042 = vadd.f32 %v881, %v1041
        %v1043 = vpop.f32.mrf.mxu0
        %1044 = vmatprep.mubr.bf16.mxu0 0
        %1045 = vmatmul.mubr.bf16.gmra.mxu0 %v568
        %v1046 = vpop.f32.mrf.mxu0
        %v1047 = vadd.f32 %v886, %v1046
        %v1048 = vpop.f32.mrf.mxu0
        %v1049 = vpop.f32.mrf.mxu0
        %v1050 = vadd.f32 %v889, %v1049
        %v1051 = vpop.f32.mrf.mxu0
        %1052 = vmatprep.mubr.bf16.mxu0 0
        %1053 = vmatmul.mubr.bf16.gmra.mxu0 %v571
        %v1054 = vpop.f32.mrf.mxu0
        %v1055 = vadd.f32 %v894, %v1054
        %v1056 = vpop.f32.mrf.mxu0
        %v1057 = vpop.f32.mrf.mxu0
        %v1058 = vadd.f32 %v897, %v1057
        %v1059 = vpop.f32.mrf.mxu0
        %1060 = vmatprep.mubr.bf16.mxu0 0
        %1061 = vmatmul.mubr.bf16.gmra.mxu0 %v574
        %v1062 = vpop.f32.mrf.mxu0
        %v1063 = vadd.f32 %v902, %v1062
        %v1064 = vpop.f32.mrf.mxu0
        %v1065 = vpop.f32.mrf.mxu0
        %v1066 = vadd.f32 %v905, %v1065
        %v1067 = vpop.f32.mrf.mxu0
        %1068 = vmatprep.mubr.bf16.mxu0 0
        %1069 = vmatmul.mubr.bf16.gmra.mxu0 %v577
        %v1070 = vpop.f32.mrf.mxu0
        %v1071 = vadd.f32 %v910, %v1070
        %v1072 = vpop.f32.mrf.mxu0
        %v1073 = vpop.f32.mrf.mxu0
        %v1074 = vadd.f32 %v913, %v1073
        %v1075 = vpop.f32.mrf.mxu0
        %1076 = vmatprep.mubr.bf16.mxu0 0
        %1077 = vmatmul.mubr.bf16.gmra.mxu0 %v580
        %v1078 = vpop.f32.mrf.mxu0
        %v1079 = vadd.f32 %v918, %v1078
        %v1080 = vpop.f32.mrf.mxu0
        %v1081 = vpop.f32.mrf.mxu0
        %v1082 = vadd.f32 %v921, %v1081
        %v1083 = vpop.f32.mrf.mxu0
        %1084 = vmatprep.mubr.bf16.mxu0 0
        %1085 = vmatmul.mubr.bf16.gmra.mxu0 %v583
        %v1086 = vpop.f32.mrf.mxu0
        %v1087 = vadd.f32 %v926, %v1086
        %v1088 = vpop.f32.mrf.mxu0
        %v1089 = vpop.f32.mrf.mxu0
        %v1090 = vadd.f32 %v929, %v1089
        %v1091 = vpop.f32.mrf.mxu0
        %1092 = vmatprep.mubr.bf16.mxu0 0
        %1093 = vmatmul.mubr.bf16.gmra.mxu0 %v586
        %v1094 = vpop.f32.mrf.mxu0
        %v1095 = vadd.f32 %v934, %v1094
        %v1096 = vpop.f32.mrf.mxu0
        %v1097 = vpop.f32.mrf.mxu0
        %v1098 = vadd.f32 %v937, %v1097
        %v1099 = vpop.f32.mrf.mxu0
        %1100 = vdwg.mxu0
        %v1101 = vmax.f32 %v975, 0.0
        %v1102 = vmax.f32 %v978, 0.0
        %v1103 = vmax.f32 %v983, 0.0
        %v1104 = vmax.f32 %v986, 0.0
        %v1105 = vmax.f32 %v991, 0.0
        %v1106 = vmax.f32 %v994, 0.0
        %v1107 = vmax.f32 %v999, 0.0
        %v1108 = vmax.f32 %v1002, 0.0
        %v1109 = vmax.f32 %v1007, 0.0
        %v1110 = vmax.f32 %v1010, 0.0
        %v1111 = vmax.f32 %v1015, 0.0
        %v1112 = vmax.f32 %v1018, 0.0
        %v1113 = vmax.f32 %v1023, 0.0
        %v1114 = vmax.f32 %v1026, 0.0
        %v1115 = vmax.f32 %v1031, 0.0
        %v1116 = vmax.f32 %v1034, 0.0
        %v1117 = vmax.f32 %v1039, 0.0
        %v1118 = vmax.f32 %v1042, 0.0
        %v1119 = vmax.f32 %v1047, 0.0
        %v1120 = vmax.f32 %v1050, 0.0
        %v1121 = vmax.f32 %v1055, 0.0
        %v1122 = vmax.f32 %v1058, 0.0
        %v1123 = vmax.f32 %v1063, 0.0
        %v1124 = vmax.f32 %v1066, 0.0
        %v1125 = vmax.f32 %v1071, 0.0
        %v1126 = vmax.f32 %v1074, 0.0
        %v1127 = vmax.f32 %v1079, 0.0
        %v1128 = vmax.f32 %v1082, 0.0
        %v1129 = vmax.f32 %v1087, 0.0
        %v1130 = vmax.f32 %v1090, 0.0
        %v1131 = vmax.f32 %v1095, 0.0
        %v1132 = vmax.f32 %v1098, 0.0
        %v1133 = vpack.c.bf16 %v1102, %v1101
        %v1134 = vpack.c.bf16 %v1104, %v1103
        %v1135 = vpack.c.bf16 %v1106, %v1105
        %v1136 = vpack.c.bf16 %v1108, %v1107
        %v1137 = vpack.c.bf16 %v1110, %v1109
        %v1138 = vpack.c.bf16 %v1112, %v1111
        %v1139 = vpack.c.bf16 %v1114, %v1113
        %v1140 = vpack.c.bf16 %v1116, %v1115
        %v1141 = vpack.c.bf16 %v1118, %v1117
        %v1142 = vpack.c.bf16 %v1120, %v1119
        %v1143 = vpack.c.bf16 %v1122, %v1121
        %v1144 = vpack.c.bf16 %v1124, %v1123
        %v1145 = vpack.c.bf16 %v1126, %v1125
        %v1146 = vpack.c.bf16 %v1128, %v1127
        %v1147 = vpack.c.bf16 %v1130, %v1129
        %v1148 = vpack.c.bf16 %v1132, %v1131
        %v1165 = vunpack.c.l.b16 %v1133
        %v1166 = vunpack.c.h.b16 %v1133
        %v1167 = vunpack.c.l.b16 %v1134
        %v1168 = vunpack.c.h.b16 %v1134
        %v1169 = vunpack.c.l.b16 %v1135
        %v1170 = vunpack.c.h.b16 %v1135
        %v1171 = vunpack.c.l.b16 %v1136
        %v1172 = vunpack.c.h.b16 %v1136
        %v1173 = vunpack.c.l.b16 %v1137
        %v1174 = vunpack.c.h.b16 %v1137
        %v1175 = vunpack.c.l.b16 %v1138
        %v1176 = vunpack.c.h.b16 %v1138
        %v1177 = vunpack.c.l.b16 %v1139
        %v1178 = vunpack.c.h.b16 %v1139
        %v1179 = vunpack.c.l.b16 %v1140
        %v1180 = vunpack.c.h.b16 %v1140
        %v1181 = vunpack.c.l.b16 %v1141
        %v1182 = vunpack.c.h.b16 %v1141
        %v1183 = vunpack.c.l.b16 %v1142
        %v1184 = vunpack.c.h.b16 %v1142
        %v1185 = vunpack.c.l.b16 %v1143
        %v1186 = vunpack.c.h.b16 %v1143
        %v1187 = vunpack.c.l.b16 %v1144
        %v1188 = vunpack.c.h.b16 %v1144
        %v1189 = vunpack.c.l.b16 %v1145
        %v1190 = vunpack.c.h.b16 %v1145
        %v1191 = vunpack.c.l.b16 %v1146
        %v1192 = vunpack.c.h.b16 %v1146
        %v1193 = vunpack.c.l.b16 %v1147
        %v1194 = vunpack.c.h.b16 %v1147
        %v1195 = vunpack.c.l.b16 %v1148
        %v1196 = vunpack.c.h.b16 %v1148
        %v1197 = vpack.c.b16 %v1165, %v1165
        %v1198 = vpack.c.b16 %v1166, %v1166
        %v1199 = vpack.c.b16 %v1167, %v1167
        %v1200 = vpack.c.b16 %v1168, %v1168
        %v1201 = vpack.c.b16 %v1169, %v1169
        %v1202 = vpack.c.b16 %v1170, %v1170
        %v1203 = vpack.c.b16 %v1171, %v1171
        %v1204 = vpack.c.b16 %v1172, %v1172
        %v1205 = vpack.c.b16 %v1173, %v1173
        %v1206 = vpack.c.b16 %v1174, %v1174
        %v1207 = vpack.c.b16 %v1175, %v1175
        %v1208 = vpack.c.b16 %v1176, %v1176
        %v1209 = vpack.c.b16 %v1177, %v1177
        %v1210 = vpack.c.b16 %v1178, %v1178
        %v1211 = vpack.c.b16 %v1179, %v1179
        %v1212 = vpack.c.b16 %v1180, %v1180
        %v1213 = vpack.c.b16 %v1181, %v1181
        %v1214 = vpack.c.b16 %v1182, %v1182
        %v1215 = vpack.c.b16 %v1183, %v1183
        %v1216 = vpack.c.b16 %v1184, %v1184
        %v1217 = vpack.c.b16 %v1185, %v1185
        %v1218 = vpack.c.b16 %v1186, %v1186
        %v1219 = vpack.c.b16 %v1187, %v1187
        %v1220 = vpack.c.b16 %v1188, %v1188
        %v1221 = vpack.c.b16 %v1189, %v1189
        %v1222 = vpack.c.b16 %v1190, %v1190
        %v1223 = vpack.c.b16 %v1191, %v1191
        %v1224 = vpack.c.b16 %v1192, %v1192
        %v1225 = vpack.c.b16 %v1193, %v1193
        %v1226 = vpack.c.b16 %v1194, %v1194
        %v1227 = vpack.c.b16 %v1195, %v1195
        %v1228 = vpack.c.b16 %v1196, %v1196
        %1261 = vst [vmem:[%s251] sm:$0xf] %v1197
        %1262 = vst [vmem:[%s251 + $0x4] sm:$0xf] %v1198
        %1263 = vst [vmem:[%s251 + $0x8] sm:$0xf] %v1199
        %1264 = vst [vmem:[%s251 + $0xc] sm:$0xf] %v1200
        %1265 = vst [vmem:[%s251 + $0x10] sm:$0xf] %v1201
        %1266 = vst [vmem:[%s251 + $0x14] sm:$0xf] %v1202
        %1267 = vst [vmem:[%s251 + $0x18] sm:$0xf] %v1203
        %1268 = vst [vmem:[%s251 + $0x1c] sm:$0xf] %v1204
        %1269 = vst [vmem:[%s251 + $0x20] sm:$0xf] %v1205
        %1270 = vst [vmem:[%s251 + $0x24] sm:$0xf] %v1206
        %1271 = vst [vmem:[%s251 + $0x28] sm:$0xf] %v1207
        %1272 = vst [vmem:[%s251 + $0x2c] sm:$0xf] %v1208
        %1273 = vst [vmem:[%s251 + $0x30] sm:$0xf] %v1209
        %1274 = vst [vmem:[%s251 + $0x34] sm:$0xf] %v1210
        %1275 = vst [vmem:[%s251 + $0x38] sm:$0xf] %v1211
        %1276 = vst [vmem:[%s251 + $0x3c] sm:$0xf] %v1212
        %1277 = vst [vmem:[%s251 + $0x40] sm:$0xf] %v1213
        %1278 = vst [vmem:[%s251 + $0x44] sm:$0xf] %v1214
        %1279 = vst [vmem:[%s251 + $0x48] sm:$0xf] %v1215
        %1280 = vst [vmem:[%s251 + $0x4c] sm:$0xf] %v1216
        %1281 = vst [vmem:[%s251 + $0x50] sm:$0xf] %v1217
        %1282 = vst [vmem:[%s251 + $0x54] sm:$0xf] %v1218
        %1283 = vst [vmem:[%s251 + $0x58] sm:$0xf] %v1219
        %1284 = vst [vmem:[%s251 + $0x5c] sm:$0xf] %v1220
        %1285 = vst [vmem:[%s251 + $0x60] sm:$0xf] %v1221
        %1286 = vst [vmem:[%s251 + $0x64] sm:$0xf] %v1222
        %1287 = vst [vmem:[%s251 + $0x68] sm:$0xf] %v1223
        %1288 = vst [vmem:[%s251 + $0x6c] sm:$0xf] %v1224
        %1289 = vst [vmem:[%s251 + $0x70] sm:$0xf] %v1225
        %1290 = vst [vmem:[%s251 + $0x74] sm:$0xf] %v1226
        %1291 = vst [vmem:[%s251 + $0x78] sm:$0xf] %v1227
        %1292 = vst [vmem:[%s251 + $0x7c] sm:$0xf] %v1228
        %s1293 = sand.u32 %s132, 1
        %s1294 = scalar_lea.sflag [#allocation4], %s1293
        %s1295 = sand.u32 %s132, 1
        %s1296 = smul.addr %s1295, 128
        %s1297 = scalar_lea.vmem [#allocation7], %s1296
        // Predicated region
        $region41: #{tpu_custom_call.1} parent=31 // pred_check
          %p1298 = pneg %p142
        $region42: #{tpu_custom_call.1} parent=31 // pred_check_branch
          %1300 = sbr.rel (%p1298) target = $region44
        $region43: #{tpu_custom_call.1} parent=31 // pred_region
          %s1301 = smul.u32 32, %s26
          %s1303 = ssub.s32 2048, 2048
          %1304 = vsyncadd %s1294, %s1303
          %s1305 = sadd.s32 %s27, %s1301
          %s1306 = smul.addr %s1305, 64
          %s1307 = scalar_lea.hbm %s3, %s1306
          %s1308 = sshll.u32 %s1297, 4
          %s1309 = int_to_ptr.vmem [resolvable:$true] %s1308
          %1314 = dma.vmem_to_hbm [thread:$0]  %s1309, 2048, %s1307, %s1294, 64, 64, 4
        $region44: #{tpu_custom_call.1} parent=31 // pred_fallthru
          _
      $region32: #{tpu_custom_call.1} parent=5 // pred_fallthru
        _
      %p1315 = scmp.le.s32.totalorder 2, %s16
      // Predicated region
      $region45: #{tpu_custom_call.1} parent=5 // pred_check
        %p1316 = pneg %p1315
      $region46: #{tpu_custom_call.1} parent=5 // pred_check_branch
        %1318 = sbr.rel (%p1316) target = $region48
      $region47: #{tpu_custom_call.1} parent=5 // pred_region
        %s1319 = ssub.s32 %s16, 2
        // Predicated region
        $region49: #{tpu_custom_call.1} parent=47 // pred_check
          %p1320 = pneg %p148
        $region50: #{tpu_custom_call.1} parent=47 // pred_check_branch
          %1322 = sbr.rel (%p1320) target = $region52
        $region51: #{tpu_custom_call.1} parent=47 // pred_region
          %s1323 = sand.u32 %s133, 1
          %s1324 = scalar_lea.sflag [#allocation4], %s1323
          %s1325 = sand.u32 %s133, 1
          %s1326 = smul.addr %s1325, 128
          %s1327 = scalar_lea.vmem [#allocation7], %s1326
          %1328 = dma.done %s1324, 2048
        $region52: #{tpu_custom_call.1} parent=47 // pred_fallthru
          _
      $region48: #{tpu_custom_call.1} parent=5 // pred_fallthru
        _
    $region6: #{tpu_custom_call.1} parent=1 // loop_footer
      %s20 = sadd.s32 1, %s16
    $region7: #{tpu_custom_call.1} parent=1 // loop_footer_branch
      %15 = sbr.rel target = $region3
    $region8: #{tpu_custom_call.1} parent=1 // loop_exit
      _
    %1329 = vsyncpa [#allocation3], 1
    %s1330 = scalar_lea.sflag [#allocation3], 1
    %1331 = vsyncpa %s1330, 1
    %1332 = vsyncpa [#allocation6], 1
    %1333 = vsyncpa [#allocation4], 1
    %s1334 = scalar_lea.sflag [#allocation4], 1
    %1335 = vsyncpa %s1334, 1

</llo_original>
